<compile_context>
chip_gen: v7x
topology: tpu7x:2x2x1
jax: 0.10.0
libtpu: 0.0.40
codegen_flags: <defaults>
</compile_context>

<pallas_src>
import jax
import jax.numpy as jnp
from jax import lax
from jax.experimental import pallas as pl
from jax.experimental.pallas import tpu as pltpu

NPOSE = 24 * 6   # 144
NSHAPE = 10
NCAM = 3
NOUT = NPOSE + NSHAPE + NCAM   # 157
HIDDEN = 1024
OP = 256                       # lane-padded state / output width (ceil(157/128)*128)
BATCH_TILE = 256               # max rows per grid step (MXU M is free up to ~256)


def _round_up(x, m):
    return (x + m - 1) // m * m


# ---------------------------------------------------------------------------
# Fused regressor kernel: all n_iter refinement steps run inside ONE kernel
# invocation per batch tile.
#   hx = x @ A + c            (iteration-invariant, computed once)
#   state <- state + hx + state @ Bm      (n_iter times, unrolled)
# ---------------------------------------------------------------------------
def _make_fused_kernel(n_iter):
    def kernel(x_ref, a_ref, bm_ref, c_ref, init_ref, out_ref):
        hx = jnp.dot(x_ref[...], a_ref[...],
                     preferred_element_type=jnp.float32) + c_ref[...]
        bm = bm_ref[...]

        def body(_, s):
            return s + hx + jnp.dot(s, bm, preferred_element_type=jnp.float32)

        out_ref[...] = lax.fori_loop(0, n_iter, body, init_ref[...],
                                     unroll=True)
    return kernel


def regressor_mlp_fused(x_pad, init_state, fused, n_iter, bt):
    """Run n_iter regressor iterations fused in one Pallas call.

    x_pad      : (Bp, Fp) f32 padded features
    init_state : (Bp, OP) f32 padded [pose|shape|cam]
    fused      : dict with fused f32 weights A (Fp,OP), Bm (OP,OP), c (1,OP)
    returns    : (Bp, OP) f32 final state
    """
    bp, fp = x_pad.shape
    assert bp % bt == 0
    n_tiles = bp // bt

    flops = n_tiles * (2 * bt * fp * OP + n_iter * 2 * bt * OP * OP)
    bytes_accessed = 4 * (x_pad.size + fused["A"].size + fused["Bm"].size
                          + fused["c"].size + init_state.size + bp * OP)

    return pl.pallas_call(
        _make_fused_kernel(n_iter),
        out_shape=jax.ShapeDtypeStruct((bp, OP), jnp.float32),
        grid_spec=pltpu.PrefetchScalarGridSpec(
            num_scalar_prefetch=0,
            grid=(n_tiles,),
            in_specs=[
                pl.BlockSpec((bt, fp), lambda i: (i, 0)),   # x (batch tile)
                pl.BlockSpec((fp, OP), lambda i: (0, 0)),   # A  (VMEM-resident)
                pl.BlockSpec((OP, OP), lambda i: (0, 0)),   # Bm (VMEM-resident)
                pl.BlockSpec((1, OP), lambda i: (0, 0)),    # c
                pl.BlockSpec((bt, OP), lambda i: (i, 0)),   # init state tile
            ],
            out_specs=pl.BlockSpec((bt, OP), lambda i: (i, 0)),
        ),
        compiler_params=pltpu.CompilerParams(
            dimension_semantics=("parallel",),   # batch tiles independent (v7x 2xTC)
            vmem_limit_bytes=16 * 1024 * 1024,
        ),
        cost_estimate=pl.CostEstimate(
            flops=flops, transcendentals=0, bytes_accessed=bytes_accessed),
    )(x_pad, fused["A"], fused["Bm"], fused["c"], init_state)


# ---------------------------------------------------------------------------
# Parameter construction (deterministic, mimics PyTorch inits)
# ---------------------------------------------------------------------------
def init_params(key, feat_dim):
    d_in = feat_dim + NOUT
    ks = jax.random.split(key, 12)

    def linear_default(kw, kb, fan_in, fan_out):
        # PyTorch nn.Linear default: U(-1/sqrt(fan_in), 1/sqrt(fan_in))
        bound = 1.0 / jnp.sqrt(fan_in)
        w = jax.random.uniform(kw, (fan_in, fan_out), jnp.float32, -bound, bound)
        b = jax.random.uniform(kb, (fan_out,), jnp.float32, -bound, bound)
        return w, b

    def xavier_head(kw, kb, fan_in, fan_out, gain=0.01):
        bound = gain * jnp.sqrt(6.0 / (fan_in + fan_out))
        w = jax.random.uniform(kw, (fan_in, fan_out), jnp.float32, -bound, bound)
        bb = 1.0 / jnp.sqrt(fan_in)
        b = jax.random.uniform(kb, (fan_out,), jnp.float32, -bb, bb)
        return w, b

    w1, b1 = linear_default(ks[0], ks[1], d_in, HIDDEN)
    w2, b2 = linear_default(ks[2], ks[3], HIDDEN, HIDDEN)
    w_pose, b_pose = xavier_head(ks[4], ks[5], HIDDEN, NPOSE)
    w_shape, b_shape = xavier_head(ks[6], ks[7], HIDDEN, NSHAPE)
    w_cam, b_cam = xavier_head(ks[8], ks[9], HIDDEN, NCAM)

    raw = {
        "w1": w1, "b1": b1, "w2": w2, "b2": b2,
        "w_pose": w_pose, "b_pose": b_pose,
        "w_shape": w_shape, "b_shape": b_shape,
        "w_cam": w_cam, "b_cam": b_cam,
    }

    # ---- collapse the activation-free affine chain (exact at eval) ----
    fp = _round_up(feat_dim, 128)
    wd = jnp.concatenate([w_pose, w_shape, w_cam], axis=1)        # (1024, 157)
    bd = jnp.concatenate([b_pose, b_shape, b_cam])                # (157,)
    w2wd = w2 @ wd                                                # (1024, 157)
    a_mat = w1[:feat_dim] @ w2wd                                  # (feat, 157)
    bm_mat = w1[feat_dim:] @ w2wd                                 # (157, 157)
    c_vec = b1 @ w2wd + b2 @ wd + bd                              # (157,)

    A = jnp.zeros((fp, OP), jnp.float32).at[:feat_dim, :NOUT].set(a_mat)
    Bm = jnp.zeros((OP, OP), jnp.float32).at[:NOUT, :NOUT].set(bm_mat)
    C = jnp.zeros((1, OP), jnp.float32).at[0, :NOUT].set(c_vec)
    fused = {"A": A, "Bm": Bm, "c": C}

    # SMPL mean params would normally be loaded from an .npz; init deterministically.
    init_pose = 0.05 * jax.random.normal(ks[10], (1, NPOSE), jnp.float32)
    init_shape = jnp.zeros((1, NSHAPE), jnp.float32)
    init_cam = jnp.array([[0.9, 0.0, 0.0]], jnp.float32)
    return raw, fused, init_pose, init_shape, init_cam


# ---------------------------------------------------------------------------
# rot6d_to_rotmat (plain JAX glue; tiny per-element math)
# ---------------------------------------------------------------------------
def rot6d_to_rotmat(x):
    x = x.reshape(-1, 3, 2)
    a1 = x[:, :, 0]
    a2 = x[:, :, 1]
    eps = 1e-12
    b1 = a1 / jnp.maximum(jnp.linalg.norm(a1, axis=1, keepdims=True), eps)
    dot = jnp.sum(b1 * a2, axis=1, keepdims=True)
    b2u = a2 - dot * b1
    b2 = b2u / jnp.maximum(jnp.linalg.norm(b2u, axis=1, keepdims=True), eps)
    b3 = jnp.cross(b1, b2)
    return jnp.stack([b1, b2, b3], axis=-1)   # (-1, 3, 3)


# ---------------------------------------------------------------------------
# Regressor.forward (MLP hot path fully in Pallas, n_iter fused in-kernel)
# ---------------------------------------------------------------------------
def regressor_forward(x, fused, init_pose, init_shape, init_cam, n_iter=1):
    B, feat_dim = x.shape
    fp = fused["A"].shape[0]

    # pad batch to sublane-friendly 16 rows, then to a multiple of the batch tile
    bp = _round_up(B, 16)
    bt = min(bp, BATCH_TILE)
    bp = _round_up(bp, bt)

    x_pad = jnp.zeros((bp, fp), jnp.float32).at[:B, :feat_dim].set(x)

    init_state = jnp.zeros((bp, OP), jnp.float32)
    init_state = init_state.at[:B, :NPOSE].set(
        jnp.broadcast_to(init_pose, (B, NPOSE)))
    init_state = init_state.at[:B, NPOSE:NPOSE + NSHAPE].set(
        jnp.broadcast_to(init_shape, (B, NSHAPE)))
    init_state = init_state.at[:B, NPOSE + NSHAPE:NOUT].set(
        jnp.broadcast_to(init_cam, (B, NCAM)))

    out = regressor_mlp_fused(x_pad, init_state, fused, n_iter, bt)
    pred_pose = out[:B, :NPOSE]
    pred_shape = out[:B, NPOSE:NPOSE + NSHAPE]
    pred_cam = out[:B, NPOSE + NSHAPE:NOUT]

    pred_rotmat = rot6d_to_rotmat(pred_pose).reshape(B, 24, 3, 3)

    # TODO(synk): SMPL body model, `projection`, `rotation_matrix_to_angle_axis`
    # and the J_regressor branch require external SMPL asset files and are not
    # reproducible here.
    return {
        "rotmat": pred_rotmat,
        "pred_cam": pred_cam,
        "pred_shape": pred_shape,
        "pred_pose": pred_pose,
    }


if __name__ == "__main__":
    key = jax.random.PRNGKey(0)
    kx, kp = jax.random.split(key)

    B = 2
    FEAT_DIM = 64
    N_ITER = 3
    x = jax.random.normal(kx, (B, FEAT_DIM), jnp.float32)

    raw, fused, init_pose, init_shape, init_cam = init_params(kp, FEAT_DIM)

    out = regressor_forward(x, fused, init_pose, init_shape, init_cam,
                            n_iter=N_ITER)
    jax.block_until_ready(out)

    assert out["rotmat"].shape == (B, 24, 3, 3)
    assert out["pred_pose"].shape == (B, NPOSE)
    assert out["pred_shape"].shape == (B, NSHAPE)
    assert out["pred_cam"].shape == (B, NCAM)

    # -------------------------------------------------------------------
    # Reference check: plain-JAX f32 loop following the ORIGINAL (un-fused)
    # fc1 -> fc2 -> heads structure with the same weights.
    # -------------------------------------------------------------------
    wd_ref = jnp.concatenate([raw["w_pose"], raw["w_shape"], raw["w_cam"]], axis=1)
    bd_ref = jnp.concatenate([raw["b_pose"], raw["b_shape"], raw["b_cam"]])

    pose = jnp.broadcast_to(init_pose, (B, NPOSE))
    shape = jnp.broadcast_to(init_shape, (B, NSHAPE))
    cam = jnp.broadcast_to(init_cam, (B, NCAM))
    for _ in range(N_ITER):
        xc = jnp.concatenate([x, pose, shape, cam], axis=1)
        h = xc @ raw["w1"] + raw["b1"]
        h = h @ raw["w2"] + raw["b2"]
        d = h @ wd_ref + bd_ref
        pose = pose + d[:, :NPOSE]
        shape = shape + d[:, NPOSE:NPOSE + NSHAPE]
        cam = cam + d[:, NPOSE + NSHAPE:]

    assert jnp.allclose(pose, out["pred_pose"], atol=1e-2, rtol=1e-2)
    assert jnp.allclose(shape, out["pred_shape"], atol=1e-2, rtol=1e-2)
    assert jnp.allclose(cam, out["pred_cam"], atol=1e-2, rtol=1e-2)

    print("KERNEL_OK")
</pallas_src>

<mosaic_0001>
module attributes {stable_mosaic.version = 11 : i64} {
  func.func @kernel(%arg0: i32, %arg1: memref<16x128xf32, #tpu.memory_space<vmem>>, %arg2: memref<128x256xf32, #tpu.memory_space<vmem>>, %arg3: memref<256x256xf32, #tpu.memory_space<vmem>>, %arg4: memref<1x256xf32, #tpu.memory_space<vmem>>, %arg5: memref<16x256xf32, #tpu.memory_space<vmem>>, %arg6: memref<16x256xf32, #tpu.memory_space<vmem>>) attributes {dimension_semantics = [#tpu.dimension_semantics<parallel>], iteration_bounds = array<i64: 1>, scalar_prefetch = 0 : i64, scratch_operands = 0 : i64, tpu.core_type = #tpu.core_type<tc>, window_params = [{transform_indices = @transform_0, window_bounds = array<i64: 16, 128>}, {pipeline_mode = #tpu.pipeline_mode<synchronous>, transform_indices = @transform_1, window_bounds = array<i64: 128, 256>}, {pipeline_mode = #tpu.pipeline_mode<synchronous>, transform_indices = @transform_2, window_bounds = array<i64: 256, 256>}, {pipeline_mode = #tpu.pipeline_mode<synchronous>, transform_indices = @transform_3, window_bounds = array<i64: 1, 256>}, {transform_indices = @transform_4, window_bounds = array<i64: 16, 256>}, {transform_indices = @transform_5, window_bounds = array<i64: 16, 256>}]} {
    %c0 = arith.constant 0 : index
    %c0_0 = arith.constant 0 : index
    %0 = vector.load %arg1[%c0, %c0_0] : memref<16x128xf32, #tpu.memory_space<vmem>>, vector<16x128xf32>
    %c0_1 = arith.constant 0 : index
    %c0_2 = arith.constant 0 : index
    %1 = vector.load %arg2[%c0_1, %c0_2] : memref<128x256xf32, #tpu.memory_space<vmem>>, vector<128x256xf32>
    %cst = arith.constant dense<0.000000e+00> : vector<16x256xf32>
    %2 = tpu.matmul %0, %1, %cst {dimension_numbers = #tpu.dot_dimension_numbers<[1], [0], [0], [1], [0, 0, 1, 1], [], []>} : vector<16x128xf32>, vector<128x256xf32>, vector<16x256xf32> -> vector<16x256xf32>
    %c0_3 = arith.constant 0 : index
    %c0_4 = arith.constant 0 : index
    %3 = vector.load %arg4[%c0_3, %c0_4] : memref<1x256xf32, #tpu.memory_space<vmem>>, vector<1x256xf32>
    %4 = vector.broadcast %3 : vector<1x256xf32> to vector<16x256xf32>
    %5 = arith.addf %2, %4 : vector<16x256xf32>
    %c0_5 = arith.constant 0 : index
    %c0_6 = arith.constant 0 : index
    %6 = vector.load %arg3[%c0_5, %c0_6] : memref<256x256xf32, #tpu.memory_space<vmem>>, vector<256x256xf32>
    %c0_7 = arith.constant 0 : index
    %c0_8 = arith.constant 0 : index
    %7 = vector.load %arg5[%c0_7, %c0_8] : memref<16x256xf32, #tpu.memory_space<vmem>>, vector<16x256xf32>
    %c0_i32 = arith.constant 0 : i32
    %8 = arith.addf %7, %5 : vector<16x256xf32>
    %cst_9 = arith.constant dense<0.000000e+00> : vector<16x256xf32>
    %9 = tpu.matmul %7, %6, %cst_9 {dimension_numbers = #tpu.dot_dimension_numbers<[1], [0], [0], [1], [0, 0, 1, 1], [], []>} : vector<16x256xf32>, vector<256x256xf32>, vector<16x256xf32> -> vector<16x256xf32>
    %10 = arith.addf %8, %9 : vector<16x256xf32>
    %c1_i32 = arith.constant 1 : i32
    %11 = arith.addf %10, %5 : vector<16x256xf32>
    %cst_10 = arith.constant dense<0.000000e+00> : vector<16x256xf32>
    %12 = tpu.matmul %10, %6, %cst_10 {dimension_numbers = #tpu.dot_dimension_numbers<[1], [0], [0], [1], [0, 0, 1, 1], [], []>} : vector<16x256xf32>, vector<256x256xf32>, vector<16x256xf32> -> vector<16x256xf32>
    %13 = arith.addf %11, %12 : vector<16x256xf32>
    %c2_i32 = arith.constant 2 : i32
    %14 = arith.addf %13, %5 : vector<16x256xf32>
    %cst_11 = arith.constant dense<0.000000e+00> : vector<16x256xf32>
    %15 = tpu.matmul %13, %6, %cst_11 {dimension_numbers = #tpu.dot_dimension_numbers<[1], [0], [0], [1], [0, 0, 1, 1], [], []>} : vector<16x256xf32>, vector<256x256xf32>, vector<16x256xf32> -> vector<16x256xf32>
    %16 = arith.addf %14, %15 : vector<16x256xf32>
    %c0_12 = arith.constant 0 : index
    %c0_13 = arith.constant 0 : index
    %17 = vector.load %arg6[%c0_12, %c0_13] : memref<16x256xf32, #tpu.memory_space<vmem>>, vector<16x256xf32>
    tpu.vector_store %arg6[%c0_12, %c0_13], %16 {strides = array<i32>} : memref<16x256xf32, #tpu.memory_space<vmem>>, vector<16x256xf32>,
    return
  }
  func.func @transform_0(%arg0: i32) -> (i32, i32) {
    %c0_i32 = arith.constant 0 : i32
    %c0_i32_0 = arith.constant 0 : i32
    return %arg0, %c0_i32 : i32, i32
  }
  func.func @transform_1(%arg0: i32) -> (i32, i32) {
    %c0_i32 = arith.constant 0 : i32
    %c0_i32_0 = arith.constant 0 : i32
    %c0_i32_1 = arith.constant 0 : i32
    return %c0_i32, %c0_i32_0 : i32, i32
  }
  func.func @transform_2(%arg0: i32) -> (i32, i32) {
    %c0_i32 = arith.constant 0 : i32
    %c0_i32_0 = arith.constant 0 : i32
    %c0_i32_1 = arith.constant 0 : i32
    return %c0_i32, %c0_i32_0 : i32, i32
  }
  func.func @transform_3(%arg0: i32) -> (i32, i32) {
    %c0_i32 = arith.constant 0 : i32
    %c0_i32_0 = arith.constant 0 : i32
    %c0_i32_1 = arith.constant 0 : i32
    return %c0_i32, %c0_i32_0 : i32, i32
  }
  func.func @transform_4(%arg0: i32) -> (i32, i32) {
    %c0_i32 = arith.constant 0 : i32
    %c0_i32_0 = arith.constant 0 : i32
    return %arg0, %c0_i32 : i32, i32
  }
  func.func @transform_5(%arg0: i32) -> (i32, i32) {
    %c0_i32 = arith.constant 0 : i32
    %c0_i32_0 = arith.constant 0 : i32
    return %arg0, %c0_i32 : i32, i32
  }
}

</mosaic_0001>

<llo_original>
// kernel: tpu_custom_call.1
$region0: #{tpu_custom_call.1}
  #allocation0 [shape = 'u32[]', space=smem, size = 0x4, offset = 0x4, fixed_abs, tag = 'smem constant byte address 0x4 - core index']
  #allocation1 [shape = 'u32[144,128]{1,0:T(1,128)}', space=vmem, size = 0x12000, scoped, tag = 'internal scratch']
  %s0 = inlined_call_operand.hbm [shape: f32[16,128], index: 0, kind: input, shape index: {}]
  %s1 = inlined_call_operand.hbm [shape: f32[128,256], index: 1, kind: input, shape index: {}]
  %s2 = inlined_call_operand.hbm [shape: f32[256,256], index: 2, kind: input, shape index: {}]
  %s3 = inlined_call_operand.vmem [shape: f32[1,256], index: 3, kind: input, shape index: {}]
  %s4 = inlined_call_operand.hbm [shape: f32[16,256], index: 4, kind: input, shape index: {}]
  %s5 = inlined_call_operand.hbm [shape: f32[16,256], index: 5, kind: output, shape index: {}]
  %s6 = sld [smem:[#allocation0]]
  $region46: #{tpu_custom_call.1} parent=0
    _
  %s8 = ssub.s32 1, %s6
  %s9 = scalar_select 0, %s8, %s6
  $region1: #{tpu_custom_call.1} parent=0
    #allocation2 [shape = 'u8[8192]{0}', space=vmem, size = 0x2000, scoped, tag = 'input window, operand 0, single buffered']
    #allocation3 [shape = 's32[1]{0}', space=sflag, size = 0x4, scoped, tag = 'scoped memory for tpu_custom_call.1']
    #allocation4 [shape = 's32[1]{0}', space=sflag, size = 0x4, scoped, tag = 'scoped memory for tpu_custom_call.1']
    #allocation5 [shape = 'u8[131072]{0}', space=vmem, size = 0x20000, scoped, tag = 'input window, operand 1, single buffered']
    #allocation6 [shape = 's32[1]{0}', space=sflag, size = 0x4, scoped, tag = 'scoped memory for tpu_custom_call.1']
    #allocation7 [shape = 'u8[262144]{0}', space=vmem, size = 0x40000, scoped, tag = 'input window, operand 2, single buffered']
    #allocation8 [shape = 'u8[16384]{0}', space=vmem, size = 0x4000, scoped, tag = 'input window, operand 4, single buffered']
    #allocation9 [shape = 's32[1]{0}', space=sflag, size = 0x4, scoped, tag = 'scoped memory for tpu_custom_call.1']
    #allocation10 [shape = 'u8[16384]{0}', space=vmem, size = 0x4000, scoped, tag = 'output window, operand 0, single buffered']
    %10 = vsyncpa [#allocation3], 0
    %11 = vsyncpa [#allocation6], 0
    %12 = vsyncpa [#allocation9], 0
    %13 = vsyncpa [#allocation4], 0
    // Predicated region
    $region2: #{tpu_custom_call.1} parent=1 // pred_check
      _
    $region3: #{tpu_custom_call.1} parent=1 // pred_check_branch
      %15 = sbr.rel (0) target = $region5
    $region4: #{tpu_custom_call.1} parent=1 // pred_region
      %s17 = ssub.s32 256, 256
      %18 = vsyncadd [#allocation3], %s17
      %s19 = sshll.u32 [#allocation2], 4
      %s20 = int_to_ptr.vmem [resolvable:$true] %s19
      %25 = dma.hbm_to_vmem [thread:$0]  %s0, 256, %s20, [#allocation3], 128, 128, 8
    $region5: #{tpu_custom_call.1} parent=1 // pred_fallthru
      _
    // Predicated region
    $region6: #{tpu_custom_call.1} parent=1 // pred_check
      _
    $region7: #{tpu_custom_call.1} parent=1 // pred_check_branch
      %27 = sbr.rel (0) target = $region9
    $region8: #{tpu_custom_call.1} parent=1 // pred_region
      %s29 = ssub.s32 4096, 4096
      %30 = vsyncadd [#allocation6], %s29
      %s31 = sshll.u32 [#allocation5], 4
      %s32 = int_to_ptr.vmem [resolvable:$true] %s31
      %37 = dma.hbm_to_vmem [thread:$0]  %s1, 4096, %s32, [#allocation6], 256, 256, 16
    $region9: #{tpu_custom_call.1} parent=1 // pred_fallthru
      _
    // Predicated region
    $region10: #{tpu_custom_call.1} parent=1 // pred_check
      _
    $region11: #{tpu_custom_call.1} parent=1 // pred_check_branch
      %39 = sbr.rel (0) target = $region13
    $region12: #{tpu_custom_call.1} parent=1 // pred_region
      %s41 = ssub.s32 8192, 8192
      %42 = vsyncadd [#allocation6], %s41
      %s43 = sshll.u32 [#allocation7], 4
      %s44 = int_to_ptr.vmem [resolvable:$true] %s43
      %49 = dma.hbm_to_vmem [thread:$0]  %s2, 8192, %s44, [#allocation6], 256, 256, 16
    $region13: #{tpu_custom_call.1} parent=1 // pred_fallthru
      _
    // Predicated region
    $region14: #{tpu_custom_call.1} parent=1 // pred_check
      _
    $region15: #{tpu_custom_call.1} parent=1 // pred_check_branch
      %51 = sbr.rel (0) target = $region17
    $region16: #{tpu_custom_call.1} parent=1 // pred_region
      _
    $region17: #{tpu_custom_call.1} parent=1 // pred_fallthru
      _
    // Predicated region
    $region18: #{tpu_custom_call.1} parent=1 // pred_check
      _
    $region19: #{tpu_custom_call.1} parent=1 // pred_check_branch
      %53 = sbr.rel (0) target = $region21
    $region20: #{tpu_custom_call.1} parent=1 // pred_region
      %s55 = ssub.s32 512, 512
      %56 = vsyncadd [#allocation9], %s55
      %s57 = sshll.u32 [#allocation8], 4
      %s58 = int_to_ptr.vmem [resolvable:$true] %s57
      %63 = dma.hbm_to_vmem [thread:$0]  %s4, 512, %s58, [#allocation9], 256, 256, 16
    $region21: #{tpu_custom_call.1} parent=1 // pred_fallthru
      _
    // Predicated region
    $region22: #{tpu_custom_call.1} parent=1 // pred_check
      _
    $region23: #{tpu_custom_call.1} parent=1 // pred_check_branch
      %65 = sbr.rel (0) target = $region25
    $region24: #{tpu_custom_call.1} parent=1 // pred_region
      %66 = dma.done [#allocation3], 256
    $region25: #{tpu_custom_call.1} parent=1 // pred_fallthru
      _
    // Predicated region
    $region26: #{tpu_custom_call.1} parent=1 // pred_check
      _
    $region27: #{tpu_custom_call.1} parent=1 // pred_check_branch
      %68 = sbr.rel (0) target = $region29
    $region28: #{tpu_custom_call.1} parent=1 // pred_region
      %69 = dma.done [#allocation6], 4096
    $region29: #{tpu_custom_call.1} parent=1 // pred_fallthru
      _
    // Predicated region
    $region30: #{tpu_custom_call.1} parent=1 // pred_check
      _
    $region31: #{tpu_custom_call.1} parent=1 // pred_check_branch
      %71 = sbr.rel (0) target = $region33
    $region32: #{tpu_custom_call.1} parent=1 // pred_region
      %72 = dma.done [#allocation6], 8192
    $region33: #{tpu_custom_call.1} parent=1 // pred_fallthru
      _
    // Predicated region
    $region34: #{tpu_custom_call.1} parent=1 // pred_check
      _
    $region35: #{tpu_custom_call.1} parent=1 // pred_check_branch
      %74 = sbr.rel (0) target = $region37
    $region36: #{tpu_custom_call.1} parent=1 // pred_region
      %75 = dma.done [#allocation9], 512
    $region37: #{tpu_custom_call.1} parent=1 // pred_fallthru
      _
    %v76 = vld [vmem:[#allocation2] sm:$0xff]
    %v77 = vld [vmem:[#allocation2 + $0x8] sm:$0xff]
    %v78 = vld [vmem:[#allocation5] sm:$0xff]
    %v79 = vld [vmem:[#allocation5 + $0x8] sm:$0xff]
    %v80 = vld [vmem:[#allocation5 + $0x10] sm:$0xff]
    %v81 = vld [vmem:[#allocation5 + $0x18] sm:$0xff]
    %v82 = vld [vmem:[#allocation5 + $0x20] sm:$0xff]
    %v83 = vld [vmem:[#allocation5 + $0x28] sm:$0xff]
    %v84 = vld [vmem:[#allocation5 + $0x30] sm:$0xff]
    %v85 = vld [vmem:[#allocation5 + $0x38] sm:$0xff]
    %v86 = vld [vmem:[#allocation5 + $0x40] sm:$0xff]
    %v87 = vld [vmem:[#allocation5 + $0x48] sm:$0xff]
    %v88 = vld [vmem:[#allocation5 + $0x50] sm:$0xff]
    %v89 = vld [vmem:[#allocation5 + $0x58] sm:$0xff]
    %v90 = vld [vmem:[#allocation5 + $0x60] sm:$0xff]
    %v91 = vld [vmem:[#allocation5 + $0x68] sm:$0xff]
    %v92 = vld [vmem:[#allocation5 + $0x70] sm:$0xff]
    %v93 = vld [vmem:[#allocation5 + $0x78] sm:$0xff]
    %v94 = vld [vmem:[#allocation5 + $0x80] sm:$0xff]
    %v95 = vld [vmem:[#allocation5 + $0x88] sm:$0xff]
    %v96 = vld [vmem:[#allocation5 + $0x90] sm:$0xff]
    %v97 = vld [vmem:[#allocation5 + $0x98] sm:$0xff]
    %v98 = vld [vmem:[#allocation5 + $0xa0] sm:$0xff]
    %v99 = vld [vmem:[#allocation5 + $0xa8] sm:$0xff]
    %v100 = vld [vmem:[#allocation5 + $0xb0] sm:$0xff]
    %v101 = vld [vmem:[#allocation5 + $0xb8] sm:$0xff]
    %v102 = vld [vmem:[#allocation5 + $0xc0] sm:$0xff]
    %v103 = vld [vmem:[#allocation5 + $0xc8] sm:$0xff]
    %v104 = vld [vmem:[#allocation5 + $0xd0] sm:$0xff]
    %v105 = vld [vmem:[#allocation5 + $0xd8] sm:$0xff]
    %v106 = vld [vmem:[#allocation5 + $0xe0] sm:$0xff]
    %v107 = vld [vmem:[#allocation5 + $0xe8] sm:$0xff]
    %v108 = vld [vmem:[#allocation5 + $0xf0] sm:$0xff]
    %v109 = vld [vmem:[#allocation5 + $0xf8] sm:$0xff]
    %v110 = vld [vmem:[%s3] sm:$0x3]
    %v112 = vlaneseq
    %v113 = vshrl.u32 %v112, 7
    %v114 = vsub.s32 0, %v113
    %v115 = vrot.slane %v110, %v114
    %v116 = vlaneseq
    %v117 = vshrl.u32 %v116, 7
    %v118 = vsub.s32 1, %v117
    %v119 = vrot.slane %v110, %v118
    %122 = vmatprep.subr.mxu0 %v79
    %123 = vmatpush1.msra.mxu0 %v78
    %124 = vmatprep.subr.mxu0 %v81
    %125 = vmatpush1.msra.mxu0 %v80
    %126 = vmatprep.subr.mxu0 %v83
    %127 = vmatpush1.msra.mxu0 %v82
    %128 = vmatprep.subr.mxu0 %v85
    %129 = vmatpush1.msra.mxu0 %v84
    %130 = vmatprep.subr.mxu0 %v87
    %131 = vmatpush1.msra.mxu0 %v86
    %132 = vmatprep.subr.mxu0 %v89
    %133 = vmatpush1.msra.mxu0 %v88
    %134 = vmatprep.subr.mxu0 %v91
    %135 = vmatpush1.msra.mxu0 %v90
    %136 = vmatprep.subr.mxu0 %v93
    %137 = vmatpush1.msra.mxu0 %v92
    %138 = vmatprep.subr.mxu0 %v95
    %139 = vmatpush1.msra.mxu0 %v94
    %140 = vmatprep.subr.mxu0 %v97
    %141 = vmatpush1.msra.mxu0 %v96
    %142 = vmatprep.subr.mxu0 %v99
    %143 = vmatpush1.msra.mxu0 %v98
    %144 = vmatprep.subr.mxu0 %v101
    %145 = vmatpush1.msra.mxu0 %v100
    %146 = vmatprep.subr.mxu0 %v103
    %147 = vmatpush1.msra.mxu0 %v102
    %148 = vmatprep.subr.mxu0 %v105
    %149 = vmatpush1.msra.mxu0 %v104
    %150 = vmatprep.subr.mxu0 %v107
    %151 = vmatpush1.msra.mxu0 %v106
    %152 = vmatprep.subr.mxu0 %v109
    %153 = vmatpush1.msra.mxu0 %v108
    %154 = vmatprep.subr.mxu0 0.0
    %155 = vmatpush1.msra.mxu0 0.0
    %156 = vmatprep.subr.mxu0 0.0
    %157 = vmatpush1.msra.mxu0 0.0
    %158 = vmatprep.subr.mxu0 0.0
    %159 = vmatpush1.msra.mxu0 0.0
    %160 = vmatprep.subr.mxu0 0.0
    %161 = vmatpush1.msra.mxu0 0.0
    %162 = vmatprep.subr.mxu0 0.0
    %163 = vmatpush1.msra.mxu0 0.0
    %164 = vmatprep.subr.mxu0 0.0
    %165 = vmatpush1.msra.mxu0 0.0
    %166 = vmatprep.subr.mxu0 0.0
    %167 = vmatpush1.msra.mxu0 0.0
    %168 = vmatprep.subr.mxu0 0.0
    %169 = vmatpush1.msra.mxu0 0.0
    %170 = vmatprep.subr.mxu0 0.0
    %171 = vmatpush1.msra.mxu0 0.0
    %172 = vmatprep.subr.mxu0 0.0
    %173 = vmatpush1.msra.mxu0 0.0
    %174 = vmatprep.subr.mxu0 0.0
    %175 = vmatpush1.msra.mxu0 0.0
    %176 = vmatprep.subr.mxu0 0.0
    %177 = vmatpush1.msra.mxu0 0.0
    %178 = vmatprep.subr.mxu0 0.0
    %179 = vmatpush1.msra.mxu0 0.0
    %180 = vmatprep.subr.mxu0 0.0
    %181 = vmatpush1.msra.mxu0 0.0
    %182 = vmatprep.subr.mxu0 0.0
    %183 = vmatpush1.msra.mxu0 0.0
    %184 = vmatprep.subr.mxu0 0.0
    %185 = vmatpush1.msra.mxu0 0.0
    %186 = vmatprep.mubr.f32.mxu0 0.0
    %187 = vmatmul.mubr.f32.gmra.mrb[0].mxu0 %v76
    %v188 = vpop.f32.mrb[0].mxu0
    %v189 = vadd.f32 %v115, %v188
    %v190 = vpop.f32.mrb[0].mxu0
    %v191 = vadd.f32 %v119, %v190
    %192 = vmatprep.mubr.f32.mxu0 0.0
    %193 = vmatmul.mubr.f32.gmra.mrb[0].mxu0 %v77
    %v194 = vpop.f32.mrb[0].mxu0
    %v195 = vadd.f32 %v115, %v194
    %v196 = vpop.f32.mrb[0].mxu0
    %v197 = vadd.f32 %v119, %v196
    %198 = vdwg.mxu0
    %v199 = vld [vmem:[#allocation7] sm:$0xff]
    %v200 = vld [vmem:[#allocation7 + $0x8] sm:$0xff]
    %v201 = vld [vmem:[#allocation7 + $0x10] sm:$0xff]
    %v202 = vld [vmem:[#allocation7 + $0x18] sm:$0xff]
    %v203 = vld [vmem:[#allocation7 + $0x20] sm:$0xff]
    %v204 = vld [vmem:[#allocation7 + $0x28] sm:$0xff]
    %v205 = vld [vmem:[#allocation7 + $0x30] sm:$0xff]
    %v206 = vld [vmem:[#allocation7 + $0x38] sm:$0xff]
    %v207 = vld [vmem:[#allocation7 + $0x40] sm:$0xff]
    %v208 = vld [vmem:[#allocation7 + $0x48] sm:$0xff]
    %v209 = vld [vmem:[#allocation7 + $0x50] sm:$0xff]
    %v210 = vld [vmem:[#allocation7 + $0x58] sm:$0xff]
    %v211 = vld [vmem:[#allocation7 + $0x60] sm:$0xff]
    %v212 = vld [vmem:[#allocation7 + $0x68] sm:$0xff]
    %v213 = vld [vmem:[#allocation7 + $0x70] sm:$0xff]
    %v214 = vld [vmem:[#allocation7 + $0x78] sm:$0xff]
    %v215 = vld [vmem:[#allocation7 + $0x80] sm:$0xff]
    %v216 = vld [vmem:[#allocation7 + $0x88] sm:$0xff]
    %v217 = vld [vmem:[#allocation7 + $0x90] sm:$0xff]
    %v218 = vld [vmem:[#allocation7 + $0x98] sm:$0xff]
    %v219 = vld [vmem:[#allocation7 + $0xa0] sm:$0xff]
    %v220 = vld [vmem:[#allocation7 + $0xa8] sm:$0xff]
    %v221 = vld [vmem:[#allocation7 + $0xb0] sm:$0xff]
    %v222 = vld [vmem:[#allocation7 + $0xb8] sm:$0xff]
    %v223 = vld [vmem:[#allocation7 + $0xc0] sm:$0xff]
    %v224 = vld [vmem:[#allocation7 + $0xc8] sm:$0xff]
    %v225 = vld [vmem:[#allocation7 + $0xd0] sm:$0xff]
    %v226 = vld [vmem:[#allocation7 + $0xd8] sm:$0xff]
    %v227 = vld [vmem:[#allocation7 + $0xe0] sm:$0xff]
    %v228 = vld [vmem:[#allocation7 + $0xe8] sm:$0xff]
    %v229 = vld [vmem:[#allocation7 + $0xf0] sm:$0xff]
    %v230 = vld [vmem:[#allocation7 + $0xf8] sm:$0xff]
    %v231 = vld [vmem:[#allocation7 + $0x100] sm:$0xff]
    %v232 = vld [vmem:[#allocation7 + $0x108] sm:$0xff]
    %v233 = vld [vmem:[#allocation7 + $0x110] sm:$0xff]
    %v234 = vld [vmem:[#allocation7 + $0x118] sm:$0xff]
    %v235 = vld [vmem:[#allocation7 + $0x120] sm:$0xff]
    %v236 = vld [vmem:[#allocation7 + $0x128] sm:$0xff]
    %v237 = vld [vmem:[#allocation7 + $0x130] sm:$0xff]
    %v238 = vld [vmem:[#allocation7 + $0x138] sm:$0xff]
    %v239 = vld [vmem:[#allocation7 + $0x140] sm:$0xff]
    %v240 = vld [vmem:[#allocation7 + $0x148] sm:$0xff]
    %v241 = vld [vmem:[#allocation7 + $0x150] sm:$0xff]
    %v242 = vld [vmem:[#allocation7 + $0x158] sm:$0xff]
    %v243 = vld [vmem:[#allocation7 + $0x160] sm:$0xff]
    %v244 = vld [vmem:[#allocation7 + $0x168] sm:$0xff]
    %v245 = vld [vmem:[#allocation7 + $0x170] sm:$0xff]
    %v246 = vld [vmem:[#allocation7 + $0x178] sm:$0xff]
    %v247 = vld [vmem:[#allocation7 + $0x180] sm:$0xff]
    %v248 = vld [vmem:[#allocation7 + $0x188] sm:$0xff]
    %v249 = vld [vmem:[#allocation7 + $0x190] sm:$0xff]
    %v250 = vld [vmem:[#allocation7 + $0x198] sm:$0xff]
    %v251 = vld [vmem:[#allocation7 + $0x1a0] sm:$0xff]
    %v252 = vld [vmem:[#allocation7 + $0x1a8] sm:$0xff]
    %v253 = vld [vmem:[#allocation7 + $0x1b0] sm:$0xff]
    %v254 = vld [vmem:[#allocation7 + $0x1b8] sm:$0xff]
    %v255 = vld [vmem:[#allocation7 + $0x1c0] sm:$0xff]
    %v256 = vld [vmem:[#allocation7 + $0x1c8] sm:$0xff]
    %v257 = vld [vmem:[#allocation7 + $0x1d0] sm:$0xff]
    %v258 = vld [vmem:[#allocation7 + $0x1d8] sm:$0xff]
    %v259 = vld [vmem:[#allocation7 + $0x1e0] sm:$0xff]
    %v260 = vld [vmem:[#allocation7 + $0x1e8] sm:$0xff]
    %v261 = vld [vmem:[#allocation7 + $0x1f0] sm:$0xff]
    %v262 = vld [vmem:[#allocation7 + $0x1f8] sm:$0xff]
    %v263 = vld [vmem:[#allocation8] sm:$0xff]
    %v264 = vld [vmem:[#allocation8 + $0x8] sm:$0xff]
    %v265 = vld [vmem:[#allocation8 + $0x10] sm:$0xff]
    %v266 = vld [vmem:[#allocation8 + $0x18] sm:$0xff]
    %v267 = vadd.f32 %v263, %v189
    %v268 = vadd.f32 %v264, %v191
    %v269 = vadd.f32 %v265, %v195
    %v270 = vadd.f32 %v266, %v197
    %271 = vmatprep.subr.mxu0 %v200
    %272 = vmatpush1.msra.mxu0 %v199
    %273 = vmatprep.subr.mxu0 %v202
    %274 = vmatpush1.msra.mxu0 %v201
    %275 = vmatprep.subr.mxu0 %v204
    %276 = vmatpush1.msra.mxu0 %v203
    %277 = vmatprep.subr.mxu0 %v206
    %278 = vmatpush1.msra.mxu0 %v205
    %279 = vmatprep.subr.mxu0 %v208
    %280 = vmatpush1.msra.mxu0 %v207
    %281 = vmatprep.subr.mxu0 %v210
    %282 = vmatpush1.msra.mxu0 %v209
    %283 = vmatprep.subr.mxu0 %v212
    %284 = vmatpush1.msra.mxu0 %v211
    %285 = vmatprep.subr.mxu0 %v214
    %286 = vmatpush1.msra.mxu0 %v213
    %287 = vmatprep.subr.mxu0 %v216
    %288 = vmatpush1.msra.mxu0 %v215
    %289 = vmatprep.subr.mxu0 %v218
    %290 = vmatpush1.msra.mxu0 %v217
    %291 = vmatprep.subr.mxu0 %v220
    %292 = vmatpush1.msra.mxu0 %v219
    %293 = vmatprep.subr.mxu0 %v222
    %294 = vmatpush1.msra.mxu0 %v221
    %295 = vmatprep.subr.mxu0 %v224
    %296 = vmatpush1.msra.mxu0 %v223
    %297 = vmatprep.subr.mxu0 %v226
    %298 = vmatpush1.msra.mxu0 %v225
    %299 = vmatprep.subr.mxu0 %v228
    %300 = vmatpush1.msra.mxu0 %v227
    %301 = vmatprep.subr.mxu0 %v230
    %302 = vmatpush1.msra.mxu0 %v229
    %303 = vmatprep.subr.mxu0 %v232
    %304 = vmatpush1.msra.mxu0 %v231
    %305 = vmatprep.subr.mxu0 %v234
    %306 = vmatpush1.msra.mxu0 %v233
    %307 = vmatprep.subr.mxu0 %v236
    %308 = vmatpush1.msra.mxu0 %v235
    %309 = vmatprep.subr.mxu0 %v238
    %310 = vmatpush1.msra.mxu0 %v237
    %311 = vmatprep.subr.mxu0 %v240
    %312 = vmatpush1.msra.mxu0 %v239
    %313 = vmatprep.subr.mxu0 %v242
    %314 = vmatpush1.msra.mxu0 %v241
    %315 = vmatprep.subr.mxu0 %v244
    %316 = vmatpush1.msra.mxu0 %v243
    %317 = vmatprep.subr.mxu0 %v246
    %318 = vmatpush1.msra.mxu0 %v245
    %319 = vmatprep.subr.mxu0 %v248
    %320 = vmatpush1.msra.mxu0 %v247
    %321 = vmatprep.subr.mxu0 %v250
    %322 = vmatpush1.msra.mxu0 %v249
    %323 = vmatprep.subr.mxu0 %v252
    %324 = vmatpush1.msra.mxu0 %v251
    %325 = vmatprep.subr.mxu0 %v254
    %326 = vmatpush1.msra.mxu0 %v253
    %327 = vmatprep.subr.mxu0 %v256
    %328 = vmatpush1.msra.mxu0 %v255
    %329 = vmatprep.subr.mxu0 %v258
    %330 = vmatpush1.msra.mxu0 %v257
    %331 = vmatprep.subr.mxu0 %v260
    %332 = vmatpush1.msra.mxu0 %v259
    %333 = vmatprep.subr.mxu0 %v262
    %334 = vmatpush1.msra.mxu0 %v261
    %335 = vmatprep.mubr.f32.mxu0 %v264
    %336 = vmatmul.mubr.f32.gmra.mrb[0].mxu0 %v263
    %v337 = vpop.f32.mrb[0].mxu0
    %v338 = vadd.f32 0.0, %v337
    %v339 = vpop.f32.mrb[0].mxu0
    %v340 = vadd.f32 0.0, %v339
    %341 = vmatprep.mubr.f32.mxu0 %v266
    %342 = vmatmul.mubr.f32.gmra.mrb[0].mxu0 %v265
    %v343 = vpop.f32.mrb[0].mxu0
    %v344 = vadd.f32 0.0, %v343
    %v345 = vpop.f32.mrb[0].mxu0
    %v346 = vadd.f32 0.0, %v345
    %347 = vdwg.mxu0
    %v348 = vadd.f32 %v267, %v338
    %v349 = vadd.f32 %v268, %v340
    %v350 = vadd.f32 %v269, %v344
    %v351 = vadd.f32 %v270, %v346
    %v352 = vadd.f32 %v348, %v189
    %v353 = vadd.f32 %v349, %v191
    %v354 = vadd.f32 %v350, %v195
    %v355 = vadd.f32 %v351, %v197
    %356 = vmatprep.subr.mxu0 %v200
    %357 = vmatpush1.msra.mxu0 %v199
    %358 = vmatprep.subr.mxu0 %v202
    %359 = vmatpush1.msra.mxu0 %v201
    %360 = vmatprep.subr.mxu0 %v204
    %361 = vmatpush1.msra.mxu0 %v203
    %362 = vmatprep.subr.mxu0 %v206
    %363 = vmatpush1.msra.mxu0 %v205
    %364 = vmatprep.subr.mxu0 %v208
    %365 = vmatpush1.msra.mxu0 %v207
    %366 = vmatprep.subr.mxu0 %v210
    %367 = vmatpush1.msra.mxu0 %v209
    %368 = vmatprep.subr.mxu0 %v212
    %369 = vmatpush1.msra.mxu0 %v211
    %370 = vmatprep.subr.mxu0 %v214
    %371 = vmatpush1.msra.mxu0 %v213
    %372 = vmatprep.subr.mxu0 %v216
    %373 = vmatpush1.msra.mxu0 %v215
    %374 = vmatprep.subr.mxu0 %v218
    %375 = vmatpush1.msra.mxu0 %v217
    %376 = vmatprep.subr.mxu0 %v220
    %377 = vmatpush1.msra.mxu0 %v219
    %378 = vmatprep.subr.mxu0 %v222
    %379 = vmatpush1.msra.mxu0 %v221
    %380 = vmatprep.subr.mxu0 %v224
    %381 = vmatpush1.msra.mxu0 %v223
    %382 = vmatprep.subr.mxu0 %v226
    %383 = vmatpush1.msra.mxu0 %v225
    %384 = vmatprep.subr.mxu0 %v228
    %385 = vmatpush1.msra.mxu0 %v227
    %386 = vmatprep.subr.mxu0 %v230
    %387 = vmatpush1.msra.mxu0 %v229
    %388 = vmatprep.subr.mxu0 %v232
    %389 = vmatpush1.msra.mxu0 %v231
    %390 = vmatprep.subr.mxu0 %v234
    %391 = vmatpush1.msra.mxu0 %v233
    %392 = vmatprep.subr.mxu0 %v236
    %393 = vmatpush1.msra.mxu0 %v235
    %394 = vmatprep.subr.mxu0 %v238
    %395 = vmatpush1.msra.mxu0 %v237
    %396 = vmatprep.subr.mxu0 %v240
    %397 = vmatpush1.msra.mxu0 %v239
    %398 = vmatprep.subr.mxu0 %v242
    %399 = vmatpush1.msra.mxu0 %v241
    %400 = vmatprep.subr.mxu0 %v244
    %401 = vmatpush1.msra.mxu0 %v243
    %402 = vmatprep.subr.mxu0 %v246
    %403 = vmatpush1.msra.mxu0 %v245
    %404 = vmatprep.subr.mxu0 %v248
    %405 = vmatpush1.msra.mxu0 %v247
    %406 = vmatprep.subr.mxu0 %v250
    %407 = vmatpush1.msra.mxu0 %v249
    %408 = vmatprep.subr.mxu0 %v252
    %409 = vmatpush1.msra.mxu0 %v251
    %410 = vmatprep.subr.mxu0 %v254
    %411 = vmatpush1.msra.mxu0 %v253
    %412 = vmatprep.subr.mxu0 %v256
    %413 = vmatpush1.msra.mxu0 %v255
    %414 = vmatprep.subr.mxu0 %v258
    %415 = vmatpush1.msra.mxu0 %v257
    %416 = vmatprep.subr.mxu0 %v260
    %417 = vmatpush1.msra.mxu0 %v259
    %418 = vmatprep.subr.mxu0 %v262
    %419 = vmatpush1.msra.mxu0 %v261
    %420 = vmatprep.mubr.f32.mxu0 %v349
    %421 = vmatmul.mubr.f32.gmra.mrb[0].mxu0 %v348
    %v422 = vpop.f32.mrb[0].mxu0
    %v423 = vadd.f32 0.0, %v422
    %v424 = vpop.f32.mrb[0].mxu0
    %v425 = vadd.f32 0.0, %v424
    %426 = vmatprep.mubr.f32.mxu0 %v351
    %427 = vmatmul.mubr.f32.gmra.mrb[0].mxu0 %v350
    %v428 = vpop.f32.mrb[0].mxu0
    %v429 = vadd.f32 0.0, %v428
    %v430 = vpop.f32.mrb[0].mxu0
    %v431 = vadd.f32 0.0, %v430
    %432 = vdwg.mxu0
    %v433 = vadd.f32 %v352, %v423
    %v434 = vadd.f32 %v353, %v425
    %v435 = vadd.f32 %v354, %v429
    %v436 = vadd.f32 %v355, %v431
    %v437 = vadd.f32 %v433, %v189
    %v438 = vadd.f32 %v434, %v191
    %v439 = vadd.f32 %v435, %v195
    %v440 = vadd.f32 %v436, %v197
    %441 = vmatprep.subr.mxu0 %v200
    %442 = vmatpush1.msra.mxu0 %v199
    %443 = vmatprep.subr.mxu0 %v202
    %444 = vmatpush1.msra.mxu0 %v201
    %445 = vmatprep.subr.mxu0 %v204
    %446 = vmatpush1.msra.mxu0 %v203
    %447 = vmatprep.subr.mxu0 %v206
    %448 = vmatpush1.msra.mxu0 %v205
    %449 = vmatprep.subr.mxu0 %v208
    %450 = vmatpush1.msra.mxu0 %v207
    %451 = vmatprep.subr.mxu0 %v210
    %452 = vmatpush1.msra.mxu0 %v209
    %453 = vmatprep.subr.mxu0 %v212
    %454 = vmatpush1.msra.mxu0 %v211
    %455 = vmatprep.subr.mxu0 %v214
    %456 = vmatpush1.msra.mxu0 %v213
    %457 = vmatprep.subr.mxu0 %v216
    %458 = vmatpush1.msra.mxu0 %v215
    %459 = vmatprep.subr.mxu0 %v218
    %460 = vmatpush1.msra.mxu0 %v217
    %461 = vmatprep.subr.mxu0 %v220
    %462 = vmatpush1.msra.mxu0 %v219
    %463 = vmatprep.subr.mxu0 %v222
    %464 = vmatpush1.msra.mxu0 %v221
    %465 = vmatprep.subr.mxu0 %v224
    %466 = vmatpush1.msra.mxu0 %v223
    %467 = vmatprep.subr.mxu0 %v226
    %468 = vmatpush1.msra.mxu0 %v225
    %469 = vmatprep.subr.mxu0 %v228
    %470 = vmatpush1.msra.mxu0 %v227
    %471 = vmatprep.subr.mxu0 %v230
    %472 = vmatpush1.msra.mxu0 %v229
    %473 = vmatprep.subr.mxu0 %v232
    %474 = vmatpush1.msra.mxu0 %v231
    %475 = vmatprep.subr.mxu0 %v234
    %476 = vmatpush1.msra.mxu0 %v233
    %477 = vmatprep.subr.mxu0 %v236
    %478 = vmatpush1.msra.mxu0 %v235
    %479 = vmatprep.subr.mxu0 %v238
    %480 = vmatpush1.msra.mxu0 %v237
    %481 = vmatprep.subr.mxu0 %v240
    %482 = vmatpush1.msra.mxu0 %v239
    %483 = vmatprep.subr.mxu0 %v242
    %484 = vmatpush1.msra.mxu0 %v241
    %485 = vmatprep.subr.mxu0 %v244
    %486 = vmatpush1.msra.mxu0 %v243
    %487 = vmatprep.subr.mxu0 %v246
    %488 = vmatpush1.msra.mxu0 %v245
    %489 = vmatprep.subr.mxu0 %v248
    %490 = vmatpush1.msra.mxu0 %v247
    %491 = vmatprep.subr.mxu0 %v250
    %492 = vmatpush1.msra.mxu0 %v249
    %493 = vmatprep.subr.mxu0 %v252
    %494 = vmatpush1.msra.mxu0 %v251
    %495 = vmatprep.subr.mxu0 %v254
    %496 = vmatpush1.msra.mxu0 %v253
    %497 = vmatprep.subr.mxu0 %v256
    %498 = vmatpush1.msra.mxu0 %v255
    %499 = vmatprep.subr.mxu0 %v258
    %500 = vmatpush1.msra.mxu0 %v257
    %501 = vmatprep.subr.mxu0 %v260
    %502 = vmatpush1.msra.mxu0 %v259
    %503 = vmatprep.subr.mxu0 %v262
    %504 = vmatpush1.msra.mxu0 %v261
    %505 = vmatprep.mubr.f32.mxu0 %v434
    %506 = vmatmul.mubr.f32.gmra.mrb[0].mxu0 %v433
    %v507 = vpop.f32.mrb[0].mxu0
    %v508 = vadd.f32 0.0, %v507
    %v509 = vpop.f32.mrb[0].mxu0
    %v510 = vadd.f32 0.0, %v509
    %511 = vmatprep.mubr.f32.mxu0 %v436
    %512 = vmatmul.mubr.f32.gmra.mrb[0].mxu0 %v435
    %v513 = vpop.f32.mrb[0].mxu0
    %v514 = vadd.f32 0.0, %v513
    %v515 = vpop.f32.mrb[0].mxu0
    %v516 = vadd.f32 0.0, %v515
    %517 = vdwg.mxu0
    %v518 = vadd.f32 %v437, %v508
    %v519 = vadd.f32 %v438, %v510
    %v520 = vadd.f32 %v439, %v514
    %v521 = vadd.f32 %v440, %v516
    %522 = vst [vmem:[#allocation10] sm:$0xff] %v518
    %523 = vst [vmem:[#allocation10 + $0x8] sm:$0xff] %v519
    %524 = vst [vmem:[#allocation10 + $0x10] sm:$0xff] %v520
    %525 = vst [vmem:[#allocation10 + $0x18] sm:$0xff] %v521
    // Predicated region
    $region38: #{tpu_custom_call.1} parent=1 // pred_check
      _
    $region39: #{tpu_custom_call.1} parent=1 // pred_check_branch
      %527 = sbr.rel (0) target = $region41
    $region40: #{tpu_custom_call.1} parent=1 // pred_region
      %s529 = ssub.s32 512, 512
      %530 = vsyncadd [#allocation4], %s529
      %s531 = sshll.u32 [#allocation10], 4
      %s532 = int_to_ptr.vmem [resolvable:$true] %s531
      %537 = dma.vmem_to_hbm [thread:$0]  %s532, 512, %s5, [#allocation4], 256, 256, 16
    $region41: #{tpu_custom_call.1} parent=1 // pred_fallthru
      _
    // Predicated region
    $region42: #{tpu_custom_call.1} parent=1 // pred_check
      _
    $region43: #{tpu_custom_call.1} parent=1 // pred_check_branch
      %539 = sbr.rel (0) target = $region45
    $region44: #{tpu_custom_call.1} parent=1 // pred_region
      %540 = dma.done [#allocation4], 512
    $region45: #{tpu_custom_call.1} parent=1 // pred_fallthru
      _
    %541 = vsyncpa [#allocation3], 1
    %542 = vsyncpa [#allocation6], 1
    %543 = vsyncpa [#allocation9], 1
    %544 = vsyncpa [#allocation4], 1

</llo_original>
